<compile_context>
chip_gen: v6e
topology: v6e:2x2x1
jax: 0.10.0
libtpu: 0.0.40
codegen_flags: <defaults>
</compile_context>

<pallas_src>
import numpy as np
import jax
import jax.numpy as jnp
from jax.experimental import pallas as pl
from jax.experimental.pallas import tpu as pltpu


def _round_up(x, m):
    return ((x + m - 1) // m) * m


def _pad2(a, rows, cols):
    r, c = a.shape
    if r == rows and c == cols:
        return a
    return jnp.pad(a, ((0, rows - r), (0, cols - c)))


def horseshoe_kernel(x_ref, wT_ref, ewlvT_ref, b_ref, eblv_ref, scale_ref,
                     eps_ref, o_ref, acc_mu, acc_var):
    """Grid = (M tiles, N tiles, K tiles); K is the innermost reduction axis."""
    k = pl.program_id(2)

    @pl.when(k == 0)
    def _():
        acc_mu[...] = jnp.zeros_like(acc_mu)
        acc_var[...] = jnp.zeros_like(acc_var)

    x = x_ref[...]                                   # [tm, tk]  (f32 or bf16)
    # mean path:      x      @ W^T
    acc_mu[...] += jnp.dot(x, wT_ref[...], preferred_element_type=jnp.float32)
    # variance path: (x**2)  @ exp(W_logvar)^T   (exp precomputed outside the kernel)
    acc_var[...] += jnp.dot(x * x, ewlvT_ref[...], preferred_element_type=jnp.float32)

    @pl.when(k == pl.num_programs(2) - 1)
    def _():
        mu = acc_mu[...] + b_ref[...]                # [tm, tn] + [1, tn]
        var = acc_var[...] + eblv_ref[...]
        std = jnp.sqrt(var)                          # == exp(0.5 * log(var)), cheaper & safer
        o_ref[...] = (scale_ref[...] * (mu + eps_ref[...] * std)).astype(o_ref.dtype)


def prepare_horseshoe_params(weights, bias, weights_logvar, bias_logvar,
                             use_bf16_matmul=False):
    """One-time parameter prep: pre-transpose and pre-exponentiate (hoisted EUP/transpose work)."""
    mdt = jnp.bfloat16 if use_bf16_matmul else jnp.float32
    wT = weights.T.astype(mdt)                                        # [K, N]
    exp_wlvT = jnp.exp(weights_logvar.astype(jnp.float32)).T.astype(mdt)  # [K, N]
    b = bias.reshape(1, -1).astype(jnp.float32)                       # [1, N]
    exp_blv = jnp.exp(bias_logvar.astype(jnp.float32)).reshape(1, -1)  # [1, N]
    return dict(wT=wT, exp_wlvT=exp_wlvT, b=b, exp_blv=exp_blv)


def horseshoe_forward(x, params, nodescales_mu, nodescales_log_sigma,
                      layerscale_mu, layerscale_log_sigma, eps_w, eps_scale):
    """x: [..., K]; eps_w: [..., N]; eps_scale: [N]; params from prepare_horseshoe_params."""
    wT, exp_wlvT = params["wT"], params["exp_wlvT"]
    b, exp_blv = params["b"], params["exp_blv"]
    mdt = wT.dtype

    K, N = wT.shape
    lead = x.shape[:-1]
    M = int(np.prod(lead)) if lead else 1
    x2d = x.reshape(M, K)                    # flatten batch / mc-sample dims into MXU rows
    eps2d = eps_w.reshape(M, N)

    # Horseshoe scale sample: parameter-only (N elements) -> plain JAX, once per call.
    scale_mean = 0.5 * (nodescales_mu + layerscale_mu)
    scale_var = 0.25 * (jnp.exp(nodescales_log_sigma) ** 2 +
                        jnp.exp(layerscale_log_sigma) ** 2)
    scale_sample = jnp.exp(scale_mean + eps_scale * jnp.sqrt(scale_var))
    scale_sample = scale_sample.reshape(1, N).astype(jnp.float32)

    # Lane-dense padding: K, N -> multiples of 128, M -> multiple of 8.
    Mp = _round_up(M, 8)
    Kp = _round_up(K, 128)
    Np = _round_up(N, 128)
    tm = min(Mp, 256)
    tn = min(Np, 512)
    tk = min(Kp, 512)
    Mp = _round_up(Mp, tm)
    Kp = _round_up(Kp, tk)
    Np = _round_up(Np, tn)

    xp = _pad2(x2d.astype(mdt), Mp, Kp)
    wTp = _pad2(wT, Kp, Np)
    ewTp = _pad2(exp_wlvT, Kp, Np)
    bp = _pad2(b, 1, Np)
    eblvp = _pad2(exp_blv, 1, Np)
    scalep = _pad2(scale_sample, 1, Np)
    epsp = _pad2(eps2d.astype(jnp.float32), Mp, Np)

    grid = (Mp // tm, Np // tn, Kp // tk)

    out_p = pl.pallas_call(
        horseshoe_kernel,
        out_shape=jax.ShapeDtypeStruct((Mp, Np), jnp.float32),
        grid_spec=pltpu.PrefetchScalarGridSpec(
            num_scalar_prefetch=0,
            grid=grid,
            in_specs=[
                pl.BlockSpec((tm, tk), lambda i, j, k: (i, k)),   # x
                pl.BlockSpec((tk, tn), lambda i, j, k: (k, j)),   # W^T
                pl.BlockSpec((tk, tn), lambda i, j, k: (k, j)),   # exp(W_logvar)^T
                pl.BlockSpec((1, tn), lambda i, j, k: (0, j)),    # bias
                pl.BlockSpec((1, tn), lambda i, j, k: (0, j)),    # exp(bias_logvar)
                pl.BlockSpec((1, tn), lambda i, j, k: (0, j)),    # horseshoe scale sample
                pl.BlockSpec((tm, tn), lambda i, j, k: (i, j)),   # eps_w
            ],
            out_specs=pl.BlockSpec((tm, tn), lambda i, j, k: (i, j)),
            scratch_shapes=[pltpu.VMEM((tm, tn), jnp.float32),    # mu accumulator
                            pltpu.VMEM((tm, tn), jnp.float32)],   # var accumulator
        ),
        compiler_params=pltpu.CompilerParams(
            dimension_semantics=("parallel", "parallel", "arbitrary"),
            vmem_limit_bytes=32 * 1024 * 1024,
        ),
    )(xp, wTp, ewTp, bp, eblvp, scalep, epsp)

    return out_p[:M, :N].reshape(*lead, N)


if __name__ == "__main__":
    # Small shapes consistent with the module: batch=8, in_features=32, out_features=32
    B, in_features, out_features = 8, 32, 32

    key = jax.random.PRNGKey(0)
    (k_x, k_w, k_b, k_wlv, k_blv,
     k_nsmu, k_nsls, k_lsmu, k_lsls, k_eps) = jax.random.split(key, 10)
    k_eps_w, k_eps_scale = jax.random.split(k_eps)

    prior_stdv = 1.0 / np.sqrt(in_features)

    # Deterministic "init_parameters" equivalents
    weights = prior_stdv * jax.random.normal(k_w, (out_features, in_features), jnp.float32)
    bias = jax.random.normal(k_b, (out_features,), jnp.float32)
    weights_logvar = -9.0 + 0.01 * jax.random.normal(k_wlv, (out_features, in_features), jnp.float32)
    bias_logvar = -9.0 + 0.01 * jax.random.normal(k_blv, (out_features,), jnp.float32)

    # InvGammaHalfCauchyLayer variational params used by HorseshoeLayer.forward (mu, log_sigma)
    nodescales_mu = 0.1 * jax.random.normal(k_nsmu, (out_features,), jnp.float32)
    nodescales_log_sigma = -4.0 + 0.01 * jax.random.normal(k_nsls, (out_features,), jnp.float32)
    layerscale_mu = 0.1 * jax.random.normal(k_lsmu, (1,), jnp.float32)
    layerscale_log_sigma = -4.0 + 0.01 * jax.random.normal(k_lsls, (1,), jnp.float32)

    x = jax.random.normal(k_x, (B, in_features), jnp.float32)
    eps_w = jax.random.normal(k_eps_w, (B, out_features), jnp.float32)       # activation reparam noise
    eps_scale = jax.random.normal(k_eps_scale, (out_features,), jnp.float32)  # scale reparam noise

    # TODO(synk): noise is supplied externally (deterministic) instead of torch's in-module .normal_().
    params = prepare_horseshoe_params(weights, bias, weights_logvar, bias_logvar,
                                      use_bf16_matmul=False)
    out = horseshoe_forward(x, params, nodescales_mu, nodescales_log_sigma,
                            layerscale_mu, layerscale_log_sigma, eps_w, eps_scale)
    out = jax.block_until_ready(out)

    # Pure-JAX reference
    scale_mean = 0.5 * (nodescales_mu + layerscale_mu)
    scale_var = 0.25 * (jnp.exp(nodescales_log_sigma) ** 2 + jnp.exp(layerscale_log_sigma) ** 2)
    scale_sample = jnp.exp(scale_mean + eps_scale * jnp.sqrt(scale_var))
    mu_ref = x @ weights.T + bias
    var_ref = (x ** 2) @ jnp.exp(weights_logvar).T + jnp.exp(bias_logvar)
    ref = scale_sample * (mu_ref + eps_w * jnp.sqrt(var_ref))

    np.testing.assert_allclose(np.asarray(out), np.asarray(ref), rtol=2e-5, atol=2e-5)
    print("KERNEL_OK")
</pallas_src>

<mosaic_0001>
module attributes {stable_mosaic.version = 11 : i64} {
  func.func @horseshoe_kernel(%arg0: i32, %arg1: i32, %arg2: i32, %arg3: memref<8x128xf32, #tpu.memory_space<vmem>>, %arg4: memref<128x128xf32, #tpu.memory_space<vmem>>, %arg5: memref<128x128xf32, #tpu.memory_space<vmem>>, %arg6: memref<1x128xf32, #tpu.memory_space<vmem>>, %arg7: memref<1x128xf32, #tpu.memory_space<vmem>>, %arg8: memref<1x128xf32, #tpu.memory_space<vmem>>, %arg9: memref<8x128xf32, #tpu.memory_space<vmem>>, %arg10: memref<8x128xf32, #tpu.memory_space<vmem>>, %arg11: memref<8x128xf32, #tpu.memory_space<vmem>>, %arg12: memref<8x128xf32, #tpu.memory_space<vmem>>) attributes {dimension_semantics = [#tpu.dimension_semantics<parallel>, #tpu.dimension_semantics<parallel>, #tpu.dimension_semantics<arbitrary>], iteration_bounds = array<i64: 1, 1, 1>, scalar_prefetch = 0 : i64, scratch_operands = 2 : i64, tpu.core_type = #tpu.core_type<tc>, window_params = [{transform_indices = @transform_0, window_bounds = array<i64: 8, 128>}, {transform_indices = @transform_1, window_bounds = array<i64: 128, 128>}, {transform_indices = @transform_2, window_bounds = array<i64: 128, 128>}, {transform_indices = @transform_3, window_bounds = array<i64: 1, 128>}, {transform_indices = @transform_4, window_bounds = array<i64: 1, 128>}, {transform_indices = @transform_5, window_bounds = array<i64: 1, 128>}, {transform_indices = @transform_6, window_bounds = array<i64: 8, 128>}, {transform_indices = @transform_7, window_bounds = array<i64: 8, 128>}]} {
    %c0_i32 = arith.constant 0 : i32
    %0 = arith.cmpi eq, %arg2, %c0_i32 : i32
    %1 = arith.extui %0 : i1 to i32
    %c0_i32_0 = arith.constant 0 : i32
    %2 = arith.cmpi ne, %1, %c0_i32_0 : i32
    scf.if %2 {
      %cst_17 = arith.constant 0.000000e+00 : f32
      %18 = vector.broadcast %cst_17 : f32 to vector<8x128xf32>
      %c0_18 = arith.constant 0 : index
      %c0_19 = arith.constant 0 : index
      %19 = vector.load %arg11[%c0_18, %c0_19] : memref<8x128xf32, #tpu.memory_space<vmem>>, vector<8x128xf32>
      tpu.vector_store %arg11[%c0_18, %c0_19], %18 {strides = array<i32>} : memref<8x128xf32, #tpu.memory_space<vmem>>, vector<8x128xf32>,
      %cst_20 = arith.constant 0.000000e+00 : f32
      %20 = vector.broadcast %cst_20 : f32 to vector<8x128xf32>
      %c0_21 = arith.constant 0 : index
      %c0_22 = arith.constant 0 : index
      %21 = vector.load %arg12[%c0_21, %c0_22] : memref<8x128xf32, #tpu.memory_space<vmem>>, vector<8x128xf32>
      tpu.vector_store %arg12[%c0_21, %c0_22], %20 {strides = array<i32>} : memref<8x128xf32, #tpu.memory_space<vmem>>, vector<8x128xf32>,
    } else {
    }
    %c0 = arith.constant 0 : index
    %c0_1 = arith.constant 0 : index
    %3 = vector.load %arg3[%c0, %c0_1] : memref<8x128xf32, #tpu.memory_space<vmem>>, vector<8x128xf32>
    %c0_2 = arith.constant 0 : index
    %c0_3 = arith.constant 0 : index
    %4 = vector.load %arg11[%c0_2, %c0_3] : memref<8x128xf32, #tpu.memory_space<vmem>>, vector<8x128xf32>
    %c0_4 = arith.constant 0 : index
    %c0_5 = arith.constant 0 : index
    %5 = vector.load %arg4[%c0_4, %c0_5] : memref<128x128xf32, #tpu.memory_space<vmem>>, vector<128x128xf32>
    %cst = arith.constant dense<0.000000e+00> : vector<8x128xf32>
    %6 = tpu.matmul %3, %5, %cst {dimension_numbers = #tpu.dot_dimension_numbers<[1], [0], [0], [1], [0, 0, 1, 1], [], []>} : vector<8x128xf32>, vector<128x128xf32>, vector<8x128xf32> -> vector<8x128xf32>
    %7 = arith.addf %4, %6 : vector<8x128xf32>
    %c0_6 = arith.constant 0 : index
    %c0_7 = arith.constant 0 : index
    %8 = vector.load %arg11[%c0_6, %c0_7] : memref<8x128xf32, #tpu.memory_space<vmem>>, vector<8x128xf32>
    tpu.vector_store %arg11[%c0_6, %c0_7], %7 {strides = array<i32>} : memref<8x128xf32, #tpu.memory_space<vmem>>, vector<8x128xf32>,
    %c0_8 = arith.constant 0 : index
    %c0_9 = arith.constant 0 : index
    %9 = vector.load %arg12[%c0_8, %c0_9] : memref<8x128xf32, #tpu.memory_space<vmem>>, vector<8x128xf32>
    %10 = arith.mulf %3, %3 : vector<8x128xf32>
    %c0_10 = arith.constant 0 : index
    %c0_11 = arith.constant 0 : index
    %11 = vector.load %arg5[%c0_10, %c0_11] : memref<128x128xf32, #tpu.memory_space<vmem>>, vector<128x128xf32>
    %cst_12 = arith.constant dense<0.000000e+00> : vector<8x128xf32>
    %12 = tpu.matmul %10, %11, %cst_12 {dimension_numbers = #tpu.dot_dimension_numbers<[1], [0], [0], [1], [0, 0, 1, 1], [], []>} : vector<8x128xf32>, vector<128x128xf32>, vector<8x128xf32> -> vector<8x128xf32>
    %13 = arith.addf %9, %12 : vector<8x128xf32>
    %c0_13 = arith.constant 0 : index
    %c0_14 = arith.constant 0 : index
    %14 = vector.load %arg12[%c0_13, %c0_14] : memref<8x128xf32, #tpu.memory_space<vmem>>, vector<8x128xf32>
    tpu.vector_store %arg12[%c0_13, %c0_14], %13 {strides = array<i32>} : memref<8x128xf32, #tpu.memory_space<vmem>>, vector<8x128xf32>,
    %c0_i32_15 = arith.constant 0 : i32
    %15 = arith.cmpi eq, %arg2, %c0_i32_15 : i32
    %16 = arith.extui %15 : i1 to i32
    %c0_i32_16 = arith.constant 0 : i32
    %17 = arith.cmpi ne, %16, %c0_i32_16 : i32
    scf.if %17 {
      %c0_17 = arith.constant 0 : index
      %c0_18 = arith.constant 0 : index
      %18 = vector.load %arg11[%c0_17, %c0_18] : memref<8x128xf32, #tpu.memory_space<vmem>>, vector<8x128xf32>
      %c0_19 = arith.constant 0 : index
      %c0_20 = arith.constant 0 : index
      %19 = vector.load %arg6[%c0_19, %c0_20] : memref<1x128xf32, #tpu.memory_space<vmem>>, vector<1x128xf32>
      %20 = vector.broadcast %19 : vector<1x128xf32> to vector<8x128xf32>
      %21 = arith.addf %18, %20 : vector<8x128xf32>
      %c0_21 = arith.constant 0 : index
      %c0_22 = arith.constant 0 : index
      %22 = vector.load %arg12[%c0_21, %c0_22] : memref<8x128xf32, #tpu.memory_space<vmem>>, vector<8x128xf32>
      %c0_23 = arith.constant 0 : index
      %c0_24 = arith.constant 0 : index
      %23 = vector.load %arg7[%c0_23, %c0_24] : memref<1x128xf32, #tpu.memory_space<vmem>>, vector<1x128xf32>
      %24 = vector.broadcast %23 : vector<1x128xf32> to vector<8x128xf32>
      %25 = arith.addf %22, %24 : vector<8x128xf32>
      %26 = math.sqrt %25 : vector<8x128xf32>
      %c0_25 = arith.constant 0 : index
      %c0_26 = arith.constant 0 : index
      %27 = vector.load %arg8[%c0_25, %c0_26] : memref<1x128xf32, #tpu.memory_space<vmem>>, vector<1x128xf32>
      %c0_27 = arith.constant 0 : index
      %c0_28 = arith.constant 0 : index
      %28 = vector.load %arg9[%c0_27, %c0_28] : memref<8x128xf32, #tpu.memory_space<vmem>>, vector<8x128xf32>
      %29 = arith.mulf %28, %26 : vector<8x128xf32>
      %30 = arith.addf %21, %29 : vector<8x128xf32>
      %31 = vector.broadcast %27 : vector<1x128xf32> to vector<8x128xf32>
      %32 = arith.mulf %31, %30 : vector<8x128xf32>
      %c0_29 = arith.constant 0 : index
      %c0_30 = arith.constant 0 : index
      %33 = vector.load %arg10[%c0_29, %c0_30] : memref<8x128xf32, #tpu.memory_space<vmem>>, vector<8x128xf32>
      tpu.vector_store %arg10[%c0_29, %c0_30], %32 {strides = array<i32>} : memref<8x128xf32, #tpu.memory_space<vmem>>, vector<8x128xf32>,
    } else {
    }
    return
  }
  func.func @transform_0(%arg0: i32, %arg1: i32, %arg2: i32) -> (i32, i32) {
    %c0_i32 = arith.constant 0 : i32
    return %arg0, %arg2 : i32, i32
  }
  func.func @transform_1(%arg0: i32, %arg1: i32, %arg2: i32) -> (i32, i32) {
    %c0_i32 = arith.constant 0 : i32
    return %arg2, %arg1 : i32, i32
  }
  func.func @transform_2(%arg0: i32, %arg1: i32, %arg2: i32) -> (i32, i32) {
    %c0_i32 = arith.constant 0 : i32
    return %arg2, %arg1 : i32, i32
  }
  func.func @transform_3(%arg0: i32, %arg1: i32, %arg2: i32) -> (i32, i32) {
    %c0_i32 = arith.constant 0 : i32
    %c0_i32_0 = arith.constant 0 : i32
    return %c0_i32, %arg1 : i32, i32
  }
  func.func @transform_4(%arg0: i32, %arg1: i32, %arg2: i32) -> (i32, i32) {
    %c0_i32 = arith.constant 0 : i32
    %c0_i32_0 = arith.constant 0 : i32
    return %c0_i32, %arg1 : i32, i32
  }
  func.func @transform_5(%arg0: i32, %arg1: i32, %arg2: i32) -> (i32, i32) {
    %c0_i32 = arith.constant 0 : i32
    %c0_i32_0 = arith.constant 0 : i32
    return %c0_i32, %arg1 : i32, i32
  }
  func.func @transform_6(%arg0: i32, %arg1: i32, %arg2: i32) -> (i32, i32) {
    %c0_i32 = arith.constant 0 : i32
    return %arg0, %arg1 : i32, i32
  }
  func.func @transform_7(%arg0: i32, %arg1: i32, %arg2: i32) -> (i32, i32) {
    %c0_i32 = arith.constant 0 : i32
    return %arg0, %arg1 : i32, i32
  }
}

</mosaic_0001>

<llo_original>
// kernel: tpu_custom_call.1
$region0: #{tpu_custom_call.1}
  #allocation0 [shape = 'u32[]', space=smem, size = 0x4, offset = 0x4, fixed_abs, tag = 'smem constant byte address 0x4 - core index']
  #allocation1 [shape = 'u32[144,128]{1,0:T(1,128)}', space=vmem, size = 0x12000, scoped, tag = 'internal scratch']
  #allocation2 [shape = 'f32[8,128]{1,0:T(8,128)}', space=vmem, size = 0x1000, scoped, tag = 'scratch operand']
  #allocation3 [shape = 'f32[8,128]{1,0:T(8,128)}', space=vmem, size = 0x1000, scoped, tag = 'scratch operand']
  %s0 = inlined_call_operand.hbm [shape: f32[8,128], index: 0, kind: input, shape index: {}]
  %s1 = inlined_call_operand.hbm [shape: f32[128,128], index: 1, kind: input, shape index: {}]
  %s2 = inlined_call_operand.hbm [shape: f32[128,128], index: 2, kind: input, shape index: {}]
  %s3 = inlined_call_operand.vmem [shape: f32[1,128], index: 3, kind: input, shape index: {}]
  %s4 = inlined_call_operand.vmem [shape: f32[1,128], index: 4, kind: input, shape index: {}]
  %s5 = inlined_call_operand.hbm [shape: f32[1,128], index: 5, kind: input, shape index: {}]
  %s6 = inlined_call_operand.vmem [shape: f32[8,128], index: 6, kind: input, shape index: {}]
  %s7 = inlined_call_operand.hbm [shape: f32[8,128], index: 7, kind: output, shape index: {}]
  %s8 = sld [smem:[#allocation0]]
  $region62: #{tpu_custom_call.1} parent=0
    _
  %s10 = ssub.s32 1, %s8
  %s11 = scalar_select 0, %s10, %s8
  $region1: #{tpu_custom_call.1} parent=0
    #allocation4 [shape = 'u8[4096]{0}', space=vmem, size = 0x1000, scoped, tag = 'input window, operand 0, single buffered']
    #allocation5 [shape = 's32[1]{0}', space=sflag, size = 0x4, scoped, tag = 'scoped memory for tpu_custom_call.1']
    #allocation6 [shape = 's32[1]{0}', space=sflag, size = 0x4, scoped, tag = 'scoped memory for tpu_custom_call.1']
    #allocation7 [shape = 'u8[65536]{0}', space=vmem, size = 0x10000, scoped, tag = 'input window, operand 1, single buffered']
    #allocation8 [shape = 's32[1]{0}', space=sflag, size = 0x4, scoped, tag = 'scoped memory for tpu_custom_call.1']
    #allocation9 [shape = 'u8[65536]{0}', space=vmem, size = 0x10000, scoped, tag = 'input window, operand 2, single buffered']
    #allocation10 [shape = 'u8[512]{0}', space=vmem, size = 0x400, scoped, tag = 'input window, operand 5, single buffered']
    #allocation11 [shape = 's32[1]{0}', space=sflag, size = 0x4, scoped, tag = 'scoped memory for tpu_custom_call.1']
    #allocation12 [shape = 'u8[4096]{0}', space=vmem, size = 0x1000, scoped, tag = 'output window, operand 0, single buffered']
    %12 = vsyncpa [#allocation5], 0
    %13 = vsyncpa [#allocation8], 0
    %14 = vsyncpa [#allocation11], 0
    %15 = vsyncpa [#allocation6], 0
    // Predicated region
    $region2: #{tpu_custom_call.1} parent=1 // pred_check
      _
    $region3: #{tpu_custom_call.1} parent=1 // pred_check_branch
      %17 = sbr.rel (0) target = $region5
    $region4: #{tpu_custom_call.1} parent=1 // pred_region
      %s19 = ssub.s32 128, 128
      %20 = vsyncadd [#allocation5], %s19
      %s22 = sshll.u32 [#allocation4], 4
      %s23 = int_to_ptr.vmem [resolvable:$true] %s22
      %25 = dma.hbm_to_vmem [thread:$0]  %s0, 128, %s23, [#allocation5]
    $region5: #{tpu_custom_call.1} parent=1 // pred_fallthru
      _
    // Predicated region
    $region6: #{tpu_custom_call.1} parent=1 // pred_check
      _
    $region7: #{tpu_custom_call.1} parent=1 // pred_check_branch
      %27 = sbr.rel (0) target = $region9
    $region8: #{tpu_custom_call.1} parent=1 // pred_region
      %s29 = ssub.s32 2048, 2048
      %30 = vsyncadd [#allocation8], %s29
      %s31 = sshll.u32 [#allocation7], 4
      %s32 = int_to_ptr.vmem [resolvable:$true] %s31
      %37 = dma.hbm_to_vmem [thread:$0]  %s1, 2048, %s32, [#allocation8], 128, 128, 8
    $region9: #{tpu_custom_call.1} parent=1 // pred_fallthru
      _
    // Predicated region
    $region10: #{tpu_custom_call.1} parent=1 // pred_check
      _
    $region11: #{tpu_custom_call.1} parent=1 // pred_check_branch
      %39 = sbr.rel (0) target = $region13
    $region12: #{tpu_custom_call.1} parent=1 // pred_region
      %s41 = ssub.s32 2048, 2048
      %42 = vsyncadd [#allocation8], %s41
      %s43 = sshll.u32 [#allocation9], 4
      %s44 = int_to_ptr.vmem [resolvable:$true] %s43
      %49 = dma.hbm_to_vmem [thread:$0]  %s2, 2048, %s44, [#allocation8], 128, 128, 8
    $region13: #{tpu_custom_call.1} parent=1 // pred_fallthru
      _
    // Predicated region
    $region14: #{tpu_custom_call.1} parent=1 // pred_check
      _
    $region15: #{tpu_custom_call.1} parent=1 // pred_check_branch
      %51 = sbr.rel (0) target = $region17
    $region16: #{tpu_custom_call.1} parent=1 // pred_region
      _
    $region17: #{tpu_custom_call.1} parent=1 // pred_fallthru
      _
    // Predicated region
    $region18: #{tpu_custom_call.1} parent=1 // pred_check
      _
    $region19: #{tpu_custom_call.1} parent=1 // pred_check_branch
      %53 = sbr.rel (0) target = $region21
    $region20: #{tpu_custom_call.1} parent=1 // pred_region
      _
    $region21: #{tpu_custom_call.1} parent=1 // pred_fallthru
      _
    // Predicated region
    $region22: #{tpu_custom_call.1} parent=1 // pred_check
      _
    $region23: #{tpu_custom_call.1} parent=1 // pred_check_branch
      %55 = sbr.rel (0) target = $region25
    $region24: #{tpu_custom_call.1} parent=1 // pred_region
      %s57 = ssub.s32 16, 16
      %58 = vsyncadd [#allocation11], %s57
      %s60 = sshll.u32 [#allocation10], 4
      %s61 = int_to_ptr.vmem [resolvable:$true] %s60
      %63 = dma.hbm_to_vmem [thread:$0]  %s5, 16, %s61, [#allocation11]
    $region25: #{tpu_custom_call.1} parent=1 // pred_fallthru
      _
    // Predicated region
    $region26: #{tpu_custom_call.1} parent=1 // pred_check
      _
    $region27: #{tpu_custom_call.1} parent=1 // pred_check_branch
      %65 = sbr.rel (0) target = $region29
    $region28: #{tpu_custom_call.1} parent=1 // pred_region
      _
    $region29: #{tpu_custom_call.1} parent=1 // pred_fallthru
      _
    // Predicated region
    $region30: #{tpu_custom_call.1} parent=1 // pred_check
      _
    $region31: #{tpu_custom_call.1} parent=1 // pred_check_branch
      %67 = sbr.rel (0) target = $region33
    $region32: #{tpu_custom_call.1} parent=1 // pred_region
      %68 = dma.done [#allocation5], 128
    $region33: #{tpu_custom_call.1} parent=1 // pred_fallthru
      _
    // Predicated region
    $region34: #{tpu_custom_call.1} parent=1 // pred_check
      _
    $region35: #{tpu_custom_call.1} parent=1 // pred_check_branch
      %70 = sbr.rel (0) target = $region37
    $region36: #{tpu_custom_call.1} parent=1 // pred_region
      %71 = dma.done [#allocation8], 2048
    $region37: #{tpu_custom_call.1} parent=1 // pred_fallthru
      _
    // Predicated region
    $region38: #{tpu_custom_call.1} parent=1 // pred_check
      _
    $region39: #{tpu_custom_call.1} parent=1 // pred_check_branch
      %73 = sbr.rel (0) target = $region41
    $region40: #{tpu_custom_call.1} parent=1 // pred_region
      %74 = dma.done [#allocation8], 2048
    $region41: #{tpu_custom_call.1} parent=1 // pred_fallthru
      _
    // Predicated region
    $region42: #{tpu_custom_call.1} parent=1 // pred_check
      _
    $region43: #{tpu_custom_call.1} parent=1 // pred_check_branch
      %76 = sbr.rel (0) target = $region45
    $region44: #{tpu_custom_call.1} parent=1 // pred_region
      %77 = dma.done [#allocation11], 16
    $region45: #{tpu_custom_call.1} parent=1 // pred_fallthru
      _
    %p78 = scmp.eq.s32.totalorder 0, 0
    // Predicated region
    $region46: #{tpu_custom_call.1} parent=1 // pred_check
      %p79 = pneg %p78
    $region47: #{tpu_custom_call.1} parent=1 // pred_check_branch
      %81 = sbr.rel (%p79) target = $region49
    $region48: #{tpu_custom_call.1} parent=1 // pred_region
      %82 = vst [vmem:[#allocation2] sm:$0xff] 0.0
      %83 = vst [vmem:[#allocation3] sm:$0xff] 0.0
    $region49: #{tpu_custom_call.1} parent=1 // pred_fallthru
      _
    %v84 = vld [vmem:[#allocation4] sm:$0xff]
    %v85 = vld [vmem:[#allocation2] sm:$0xff]
    %v86 = vld [vmem:[#allocation7] sm:$0xff]
    %v87 = vld [vmem:[#allocation7 + $0x8] sm:$0xff]
    %v88 = vld [vmem:[#allocation7 + $0x10] sm:$0xff]
    %v89 = vld [vmem:[#allocation7 + $0x18] sm:$0xff]
    %v90 = vld [vmem:[#allocation7 + $0x20] sm:$0xff]
    %v91 = vld [vmem:[#allocation7 + $0x28] sm:$0xff]
    %v92 = vld [vmem:[#allocation7 + $0x30] sm:$0xff]
    %v93 = vld [vmem:[#allocation7 + $0x38] sm:$0xff]
    %v94 = vld [vmem:[#allocation7 + $0x40] sm:$0xff]
    %v95 = vld [vmem:[#allocation7 + $0x48] sm:$0xff]
    %v96 = vld [vmem:[#allocation7 + $0x50] sm:$0xff]
    %v97 = vld [vmem:[#allocation7 + $0x58] sm:$0xff]
    %v98 = vld [vmem:[#allocation7 + $0x60] sm:$0xff]
    %v99 = vld [vmem:[#allocation7 + $0x68] sm:$0xff]
    %v100 = vld [vmem:[#allocation7 + $0x70] sm:$0xff]
    %v101 = vld [vmem:[#allocation7 + $0x78] sm:$0xff]
    %102 = vmatprep.subr.mxu0 0.0
    %103 = vmatpush1.msra.mxu0 %v101
    %104 = vmatprep.subr.mxu0 0.0
    %105 = vmatpush1.msra.mxu0 %v100
    %106 = vmatprep.subr.mxu0 0.0
    %107 = vmatpush1.msra.mxu0 %v99
    %108 = vmatprep.subr.mxu0 0.0
    %109 = vmatpush1.msra.mxu0 %v98
    %110 = vmatprep.subr.mxu0 0.0
    %111 = vmatpush1.msra.mxu0 %v97
    %112 = vmatprep.subr.mxu0 0.0
    %113 = vmatpush1.msra.mxu0 %v96
    %114 = vmatprep.subr.mxu0 0.0
    %115 = vmatpush1.msra.mxu0 %v95
    %116 = vmatprep.subr.mxu0 0.0
    %117 = vmatpush1.msra.mxu0 %v94
    %118 = vmatprep.subr.mxu0 0.0
    %119 = vmatpush1.msra.mxu0 %v93
    %120 = vmatprep.subr.mxu0 0.0
    %121 = vmatpush1.msra.mxu0 %v92
    %122 = vmatprep.subr.mxu0 0.0
    %123 = vmatpush1.msra.mxu0 %v91
    %124 = vmatprep.subr.mxu0 0.0
    %125 = vmatpush1.msra.mxu0 %v90
    %126 = vmatprep.subr.mxu0 0.0
    %127 = vmatpush1.msra.mxu0 %v89
    %128 = vmatprep.subr.mxu0 0.0
    %129 = vmatpush1.msra.mxu0 %v88
    %130 = vmatprep.subr.mxu0 0.0
    %131 = vmatpush1.msra.mxu0 %v87
    %132 = vmatprep.subr.mxu0 0.0
    %133 = vmatpush1.msra.mxu0 %v86
    %134 = vmatprep.subr.mxu0 0.0
    %135 = vmatpush2.msra.mxu0 0.0
    %136 = vmatprep.subr.mxu0 0.0
    %137 = vmatpush2.msra.mxu0 0.0
    %138 = vmatprep.subr.mxu0 0.0
    %139 = vmatpush2.msra.mxu0 0.0
    %140 = vmatprep.subr.mxu0 0.0
    %141 = vmatpush2.msra.mxu0 0.0
    %142 = vmatprep.subr.mxu0 0.0
    %143 = vmatpush2.msra.mxu0 0.0
    %144 = vmatprep.subr.mxu0 0.0
    %145 = vmatpush2.msra.mxu0 0.0
    %146 = vmatprep.subr.mxu0 0.0
    %147 = vmatpush2.msra.mxu0 0.0
    %148 = vmatprep.subr.mxu0 0.0
    %149 = vmatpush2.msra.mxu0 0.0
    %150 = vmatprep.subr.mxu0 0.0
    %151 = vmatpush2.msra.mxu0 0.0
    %152 = vmatprep.subr.mxu0 0.0
    %153 = vmatpush2.msra.mxu0 0.0
    %154 = vmatprep.subr.mxu0 0.0
    %155 = vmatpush2.msra.mxu0 0.0
    %156 = vmatprep.subr.mxu0 0.0
    %157 = vmatpush2.msra.mxu0 0.0
    %158 = vmatprep.subr.mxu0 0.0
    %159 = vmatpush2.msra.mxu0 0.0
    %160 = vmatprep.subr.mxu0 0.0
    %161 = vmatpush2.msra.mxu0 0.0
    %162 = vmatprep.subr.mxu0 0.0
    %163 = vmatpush2.msra.mxu0 0.0
    %164 = vmatprep.subr.mxu0 0.0
    %165 = vmatpush2.msra.mxu0 0.0
    %166 = vmatprep.mubr.f32.mxu0 0.0
    %167 = vmatmul.mubr.f32.gmra.mxu0 %v84
    %v168 = vpop.f32.mrf.mxu0
    %v169 = vadd.f32 0.0, %v168
    %v170 = vpop.f32.mrf.mxu0
    %171 = vdwg.mxu0
    %v172 = vadd.f32 %v85, %v169
    %173 = vst [vmem:[#allocation2] sm:$0xff] %v172
    %v174 = vld [vmem:[#allocation3] sm:$0xff]
    %v175 = vmul.f32 %v84, %v84
    %v176 = vld [vmem:[#allocation9] sm:$0xff]
    %v177 = vld [vmem:[#allocation9 + $0x8] sm:$0xff]
    %v178 = vld [vmem:[#allocation9 + $0x10] sm:$0xff]
    %v179 = vld [vmem:[#allocation9 + $0x18] sm:$0xff]
    %v180 = vld [vmem:[#allocation9 + $0x20] sm:$0xff]
    %v181 = vld [vmem:[#allocation9 + $0x28] sm:$0xff]
    %v182 = vld [vmem:[#allocation9 + $0x30] sm:$0xff]
    %v183 = vld [vmem:[#allocation9 + $0x38] sm:$0xff]
    %v184 = vld [vmem:[#allocation9 + $0x40] sm:$0xff]
    %v185 = vld [vmem:[#allocation9 + $0x48] sm:$0xff]
    %v186 = vld [vmem:[#allocation9 + $0x50] sm:$0xff]
    %v187 = vld [vmem:[#allocation9 + $0x58] sm:$0xff]
    %v188 = vld [vmem:[#allocation9 + $0x60] sm:$0xff]
    %v189 = vld [vmem:[#allocation9 + $0x68] sm:$0xff]
    %v190 = vld [vmem:[#allocation9 + $0x70] sm:$0xff]
    %v191 = vld [vmem:[#allocation9 + $0x78] sm:$0xff]
    %192 = vmatprep.subr.mxu0 0.0
    %193 = vmatpush1.msra.mxu0 %v191
    %194 = vmatprep.subr.mxu0 0.0
    %195 = vmatpush1.msra.mxu0 %v190
    %196 = vmatprep.subr.mxu0 0.0
    %197 = vmatpush1.msra.mxu0 %v189
    %198 = vmatprep.subr.mxu0 0.0
    %199 = vmatpush1.msra.mxu0 %v188
    %200 = vmatprep.subr.mxu0 0.0
    %201 = vmatpush1.msra.mxu0 %v187
    %202 = vmatprep.subr.mxu0 0.0
    %203 = vmatpush1.msra.mxu0 %v186
    %204 = vmatprep.subr.mxu0 0.0
    %205 = vmatpush1.msra.mxu0 %v185
    %206 = vmatprep.subr.mxu0 0.0
    %207 = vmatpush1.msra.mxu0 %v184
    %208 = vmatprep.subr.mxu0 0.0
    %209 = vmatpush1.msra.mxu0 %v183
    %210 = vmatprep.subr.mxu0 0.0
    %211 = vmatpush1.msra.mxu0 %v182
    %212 = vmatprep.subr.mxu0 0.0
    %213 = vmatpush1.msra.mxu0 %v181
    %214 = vmatprep.subr.mxu0 0.0
    %215 = vmatpush1.msra.mxu0 %v180
    %216 = vmatprep.subr.mxu0 0.0
    %217 = vmatpush1.msra.mxu0 %v179
    %218 = vmatprep.subr.mxu0 0.0
    %219 = vmatpush1.msra.mxu0 %v178
    %220 = vmatprep.subr.mxu0 0.0
    %221 = vmatpush1.msra.mxu0 %v177
    %222 = vmatprep.subr.mxu0 0.0
    %223 = vmatpush1.msra.mxu0 %v176
    %224 = vmatprep.subr.mxu0 0.0
    %225 = vmatpush2.msra.mxu0 0.0
    %226 = vmatprep.subr.mxu0 0.0
    %227 = vmatpush2.msra.mxu0 0.0
    %228 = vmatprep.subr.mxu0 0.0
    %229 = vmatpush2.msra.mxu0 0.0
    %230 = vmatprep.subr.mxu0 0.0
    %231 = vmatpush2.msra.mxu0 0.0
    %232 = vmatprep.subr.mxu0 0.0
    %233 = vmatpush2.msra.mxu0 0.0
    %234 = vmatprep.subr.mxu0 0.0
    %235 = vmatpush2.msra.mxu0 0.0
    %236 = vmatprep.subr.mxu0 0.0
    %237 = vmatpush2.msra.mxu0 0.0
    %238 = vmatprep.subr.mxu0 0.0
    %239 = vmatpush2.msra.mxu0 0.0
    %240 = vmatprep.subr.mxu0 0.0
    %241 = vmatpush2.msra.mxu0 0.0
    %242 = vmatprep.subr.mxu0 0.0
    %243 = vmatpush2.msra.mxu0 0.0
    %244 = vmatprep.subr.mxu0 0.0
    %245 = vmatpush2.msra.mxu0 0.0
    %246 = vmatprep.subr.mxu0 0.0
    %247 = vmatpush2.msra.mxu0 0.0
    %248 = vmatprep.subr.mxu0 0.0
    %249 = vmatpush2.msra.mxu0 0.0
    %250 = vmatprep.subr.mxu0 0.0
    %251 = vmatpush2.msra.mxu0 0.0
    %252 = vmatprep.subr.mxu0 0.0
    %253 = vmatpush2.msra.mxu0 0.0
    %254 = vmatprep.subr.mxu0 0.0
    %255 = vmatpush2.msra.mxu0 0.0
    %256 = vmatprep.mubr.f32.mxu0 0.0
    %257 = vmatmul.mubr.f32.gmra.mxu0 %v175
    %v258 = vpop.f32.mrf.mxu0
    %v259 = vadd.f32 0.0, %v258
    %v260 = vpop.f32.mrf.mxu0
    %261 = vdwg.mxu0
    %v262 = vadd.f32 %v174, %v259
    %263 = vst [vmem:[#allocation3] sm:$0xff] %v262
    // Predicated region
    $region50: #{tpu_custom_call.1} parent=1 // pred_check
      %p264 = pneg %p78
    $region51: #{tpu_custom_call.1} parent=1 // pred_check_branch
      %266 = sbr.rel (%p264) target = $region53
    $region52: #{tpu_custom_call.1} parent=1 // pred_region
      %v267 = vld [vmem:[#allocation2] sm:$0xff]
      %v268 = vld [vmem:[%s3] sm:$0x1]
      %v270 = vlaneseq
      %v271 = vshrl.u32 %v270, 7
      %v272 = vsub.s32 0, %v271
      %v273 = vrot.slane %v268, %v272
      %v275 = vadd.f32 %v267, %v273
      %v276 = vld [vmem:[#allocation3] sm:$0xff]
      %v277 = vld [vmem:[%s4] sm:$0x1]
      %v279 = vlaneseq
      %v280 = vshrl.u32 %v279, 7
      %v281 = vsub.s32 0, %v280
      %v282 = vrot.slane %v277, %v281
      %v284 = vadd.f32 %v276, %v282
      %v285 = vrsqrt.pop %v284
      %v286 = vmul.f32 %v284, %v285
      %vm287 = vcmp.eq.f32.partialorder %v284, inf
      %v288 = vsel %vm287, %v284, %v286
      %vm289 = vcmp.eq.f32.partialorder %v284, 0.0
      %v290 = vand.u32 %v284, 2147483648
      %v291 = vsel %vm289, %v290, %v288
      %v292 = vld [vmem:[#allocation10] sm:$0x1]
      %v293 = vld [vmem:[%s6] sm:$0xff]
      %v294 = vmul.f32 %v293, %v291
      %v295 = vadd.f32 %v275, %v294
      %v297 = vlaneseq
      %v298 = vshrl.u32 %v297, 7
      %v299 = vsub.s32 0, %v298
      %v300 = vrot.slane %v292, %v299
      %v302 = vmul.f32 %v300, %v295
      %303 = vst [vmem:[#allocation12] sm:$0xff] %v302
    $region53: #{tpu_custom_call.1} parent=1 // pred_fallthru
      _
    // Predicated region
    $region54: #{tpu_custom_call.1} parent=1 // pred_check
      _
    $region55: #{tpu_custom_call.1} parent=1 // pred_check_branch
      %305 = sbr.rel (0) target = $region57
    $region56: #{tpu_custom_call.1} parent=1 // pred_region
      %s307 = ssub.s32 128, 128
      %308 = vsyncadd [#allocation6], %s307
      %s310 = sshll.u32 [#allocation12], 4
      %s311 = int_to_ptr.vmem [resolvable:$true] %s310
      %313 = dma.vmem_to_hbm [thread:$0]  %s311, 128, %s7, [#allocation6]
    $region57: #{tpu_custom_call.1} parent=1 // pred_fallthru
      _
    // Predicated region
    $region58: #{tpu_custom_call.1} parent=1 // pred_check
      _
    $region59: #{tpu_custom_call.1} parent=1 // pred_check_branch
      %315 = sbr.rel (0) target = $region61
    $region60: #{tpu_custom_call.1} parent=1 // pred_region
      %316 = dma.done [#allocation6], 128
    $region61: #{tpu_custom_call.1} parent=1 // pred_fallthru
      _
    %317 = vsyncpa [#allocation5], 1
    %318 = vsyncpa [#allocation8], 1
    %319 = vsyncpa [#allocation11], 1
    %320 = vsyncpa [#allocation6], 1

</llo_original>
